<compile_context>
chip_gen: v7x
topology: tpu7x:2x2x1
jax: 0.10.0
libtpu: 0.0.40
codegen_flags: <defaults>
</compile_context>

<pallas_src>
import functools

import jax
import jax.numpy as jnp
from jax.experimental import pallas as pl
from jax.experimental.pallas import tpu as pltpu


def _round_up(x, m):
    return (x + m - 1) // m * m


def _gru_cell_kernel(x_ref, h_ref, wih_ref, whh_ref, bih_ref, bhh_ref,
                     hy_ref, ig_ref, rg_ref, *, Hp):
    """One row-tile of the GRU cell.

    x_ref   : (T, I_pad)   bf16
    h_ref   : (T, H_pad)   f32
    wih_ref : (I_pad, 3*H_pad) bf16   (W_ih^T, per-gate columns padded)
    whh_ref : (H_pad, 3*H_pad) bf16   (W_hh^T, per-gate columns padded)
    bih_ref / bhh_ref : (1, 3*H_pad) f32
    hy_ref  : (T, H_pad) f32
    ig_ref / rg_ref : (T, H_pad) bf16
    """
    f32 = jnp.float32
    x = x_ref[...]
    h = h_ref[...]

    # Two wide MXU contractions, f32 accumulation.
    gi = jnp.dot(x, wih_ref[...], preferred_element_type=f32) + bih_ref[...]
    gh = jnp.dot(h.astype(jnp.bfloat16), whh_ref[...],
                 preferred_element_type=f32) + bhh_ref[...]

    # Lane-aligned gate slices (Hp is a multiple of 128).
    i_r, i_i, i_n = gi[:, 0:Hp], gi[:, Hp:2 * Hp], gi[:, 2 * Hp:3 * Hp]
    h_r, h_i, h_n = gh[:, 0:Hp], gh[:, Hp:2 * Hp], gh[:, 2 * Hp:3 * Hp]

    resetgate = jax.nn.sigmoid(i_r + h_r)
    inputgate = jax.nn.sigmoid(i_i + h_i)
    newgate = jnp.tanh(i_n + resetgate * h_n)
    hy = newgate + inputgate * (h - newgate)          # interpolation stays f32

    hy_ref[...] = hy
    ig_ref[...] = inputgate.astype(ig_ref.dtype)
    rg_ref[...] = resetgate.astype(rg_ref.dtype)


def analysable_gru_cell(inp, hidden, w_ih, w_hh, b_ih=None, b_hh=None,
                        num_layers=None, tile_m_target=256,
                        vmem_limit_bytes=None):
    """Pallas implementation of AnalysableGRUCell.forward (save_dont_return=False).

    inp:    (L, B, I)   hidden: (L, B, H)
    w_ih:   (3H, I)     w_hh:   (3H, H)     b_ih / b_hh: (3H,) or None
    Returns (output, hy, gates) matching the PyTorch module.  `num_layers`
    defaults to L (the module indexes hy[num_layers - 1] for `output`).
    """
    L, B, I = inp.shape
    H = hidden.shape[-1]
    if num_layers is None:
        num_layers = L
    M = L * B

    f32, bf16 = jnp.float32, jnp.bfloat16
    I_pad = _round_up(I, 128)
    H_pad = _round_up(H, 128)

    x2 = inp.reshape(M, I).astype(f32)
    h2 = hidden.reshape(M, H).astype(f32)
    if b_ih is None:
        b_ih = jnp.zeros((3 * H,), f32)
    if b_hh is None:
        b_hh = jnp.zeros((3 * H,), f32)
    b_ih = b_ih.astype(f32)
    b_hh = b_hh.astype(f32)
    w_ih = w_ih.astype(f32)
    w_hh = w_hh.astype(f32)

    # --- per-gate padded, transposed weight slabs -> (K_pad, 3*H_pad) --------
    def pad_gate_t(w_gate, k, k_pad):            # (H, k) -> (k_pad, H_pad)
        return jnp.pad(w_gate.T, ((0, k_pad - k), (0, H_pad - H)))

    w_ih_t = jnp.concatenate(
        [pad_gate_t(w_ih[g * H:(g + 1) * H], I, I_pad) for g in range(3)],
        axis=1).astype(bf16)                     # (I_pad, 3*H_pad)
    w_hh_t = jnp.concatenate(
        [pad_gate_t(w_hh[g * H:(g + 1) * H], H, H_pad) for g in range(3)],
        axis=1).astype(bf16)                     # (H_pad, 3*H_pad)

    def pad_bias(b):                             # (3H,) -> (1, 3*H_pad)
        return jnp.concatenate(
            [jnp.pad(b[g * H:(g + 1) * H], (0, H_pad - H)) for g in range(3)]
        ).reshape(1, 3 * H_pad)

    b_ih_p = pad_bias(b_ih)
    b_hh_p = pad_bias(b_hh)

    # --- VMEM budget & row tile ---------------------------------------------
    try:
        phys_vmem = int(pltpu.get_tpu_info().vmem_capacity_bytes)
    except Exception:
        phys_vmem = 64 * 1024 * 1024             # v7x-safe floor
    if vmem_limit_bytes is None:
        # 100 MiB on the 128 MiB parts (v5e/v6e), ~48 MiB on v7x's 64 MiB.
        vmem_limit_bytes = min(phys_vmem - 16 * 1024 * 1024, 100 * 1024 * 1024)

    resident_bytes = (w_ih_t.size + w_hh_t.size) * 2 \
        + (b_ih_p.size + b_hh_p.size) * 4
    # Resident (constant-index) blocks are still allocated with the default
    # buffer count, so budget them twice.
    # TODO(synk): pipeline_mode=pl.Buffered(1) on the resident specs would
    # halve this footprint; omitted here to keep lowering maximally portable.
    budget = vmem_limit_bytes - 2 * resident_bytes - (2 << 20)
    # TODO(synk): for very large H (weight slabs alone > budget) add an N/K
    # tiling grid axis instead of relying on whole-weight residency.

    def tile_bytes(t):
        io = t * I_pad * 2 + t * H_pad * 4               # x(bf16) + h(f32) in
        io += t * H_pad * 4 + 2 * t * H_pad * 2          # hy(f32) + 2 gates(bf16)
        inter = 2 * t * 3 * H_pad * 4 + 6 * t * H_pad * 4  # gi/gh + gate temps
        return 2 * io + inter                            # I/O double-buffered

    tile_m = max(16, min(tile_m_target, _round_up(M, 16)))
    if M >= 256:
        # v7x megacore: make sure a big problem spans >= 2 grid steps.
        tile_m = min(tile_m, max(128, _round_up(pl.cdiv(M, 2), 128)))
    while tile_m > 16 and tile_bytes(tile_m) > budget:
        tile_m = max(16, _round_up(tile_m // 2, 16))
    if tile_m >= 128:
        tile_m = tile_m // 128 * 128                     # MXU-friendly rows
    else:
        tile_m = max(16, tile_m // 16 * 16)              # bf16 sublane pairs

    M_pad = _round_up(M, tile_m)
    grid = (M_pad // tile_m,)

    x_p = jnp.pad(x2, ((0, M_pad - M), (0, I_pad - I))).astype(bf16)
    h_p = jnp.pad(h2, ((0, M_pad - M), (0, H_pad - H)))

    row_spec = lambda w: pl.BlockSpec((tile_m, w), lambda i: (i, 0))
    res_spec = lambda shape: pl.BlockSpec(shape, lambda i: (0, 0))   # resident

    flops = 2 * M_pad * (I_pad + H_pad) * 3 * H_pad
    bytes_accessed = (x_p.size * 2 + h_p.size * 4
                      + M_pad * H_pad * 4 + 2 * M_pad * H_pad * 2
                      + resident_bytes)
    cost = pl.CostEstimate(flops=flops,
                           transcendentals=3 * M_pad * H_pad,
                           bytes_accessed=bytes_accessed)

    hy_p, ig_p, rg_p = pl.pallas_call(
        functools.partial(_gru_cell_kernel, Hp=H_pad),
        grid=grid,
        in_specs=[
            row_spec(I_pad),                    # x   (bf16), row-tiled
            row_spec(H_pad),                    # h   (f32),  row-tiled
            res_spec((I_pad, 3 * H_pad)),       # W_ih^T (bf16), resident
            res_spec((H_pad, 3 * H_pad)),       # W_hh^T (bf16), resident
            res_spec((1, 3 * H_pad)),           # b_ih
            res_spec((1, 3 * H_pad)),           # b_hh
        ],
        out_specs=(
            pl.BlockSpec((tile_m, H_pad), lambda i: (i, 0)),   # hy   f32
            pl.BlockSpec((tile_m, H_pad), lambda i: (i, 0)),   # ig   bf16
            pl.BlockSpec((tile_m, H_pad), lambda i: (i, 0)),   # rg   bf16
        ),
        out_shape=(
            jax.ShapeDtypeStruct((M_pad, H_pad), f32),
            jax.ShapeDtypeStruct((M_pad, H_pad), bf16),
            jax.ShapeDtypeStruct((M_pad, H_pad), bf16),
        ),
        compiler_params=pltpu.CompilerParams(
            dimension_semantics=("parallel",),
            vmem_limit_bytes=vmem_limit_bytes),
        cost_estimate=cost,
    )(x_p, h_p, w_ih_t, w_hh_t, b_ih_p, b_hh_p)

    hy = hy_p[:M, :H].reshape(L, B, H)
    inputgate = ig_p[:M, :H].reshape(L, B, H)          # bf16 gate activations
    resetgate = rg_p[:M, :H].reshape(L, B, H)
    output = hy[num_layers - 1][None]                  # == hy[L-1].clone().unsqueeze(0)
    gates = {'input_gate_activations': inputgate,
             'reset_gate_activations': resetgate}
    # TODO(synk): save_dont_return=True just stashes `gates` on the module
    # (host-side state); no kernel equivalent needed.
    return output, hy, gates


# ------------------------- references for self-test -------------------------

def _gru_math(gi, gh, hidden, H, num_layers):
    i_r, i_i, i_n = gi[..., :H], gi[..., H:2 * H], gi[..., 2 * H:]
    h_r, h_i, h_n = gh[..., :H], gh[..., H:2 * H], gh[..., 2 * H:]
    resetgate = jax.nn.sigmoid(i_r + h_r)
    inputgate = jax.nn.sigmoid(i_i + h_i)
    newgate = jnp.tanh(i_n + resetgate * h_n)
    hy = newgate + inputgate * (hidden - newgate)
    return hy[num_layers - 1][None], hy, inputgate, resetgate


def _reference_f32(inp, hidden, w_ih, w_hh, b_ih, b_hh, num_layers):
    gi = jnp.einsum('lbi,gi->lbg', inp, w_ih) + b_ih
    gh = jnp.einsum('lbh,gh->lbg', hidden, w_hh) + b_hh
    return _gru_math(gi, gh, hidden, hidden.shape[-1], num_layers)


def _reference_bf16(inp, hidden, w_ih, w_hh, b_ih, b_hh, num_layers):
    q = lambda a: a.astype(jnp.bfloat16).astype(jnp.float32)
    gi = jnp.einsum('lbi,gi->lbg', q(inp), q(w_ih)) + b_ih
    gh = jnp.einsum('lbh,gh->lbg', q(hidden), q(w_hh)) + b_hh
    return _gru_math(gi, gh, hidden, hidden.shape[-1], num_layers)


if __name__ == "__main__":
    key = jax.random.PRNGKey(0)
    num_layers, batch, input_size, hidden_size = 2, 4, 32, 32

    k = jax.random.split(key, 6)
    inp = jax.random.normal(k[0], (num_layers, batch, input_size), jnp.float32)
    hidden = jax.random.normal(k[1], (num_layers, batch, hidden_size), jnp.float32)
    # Deterministic synthetic GRU parameters (shapes per nn.GRU convention).
    w_ih = 0.1 * jax.random.normal(k[2], (3 * hidden_size, input_size), jnp.float32)
    w_hh = 0.1 * jax.random.normal(k[3], (3 * hidden_size, hidden_size), jnp.float32)
    b_ih = 0.1 * jax.random.normal(k[4], (3 * hidden_size,), jnp.float32)
    b_hh = 0.1 * jax.random.normal(k[5], (3 * hidden_size,), jnp.float32)

    output, hy, gates = analysable_gru_cell(
        inp, hidden, w_ih, w_hh, b_ih, b_hh, num_layers)
    jax.block_until_ready((output, hy, gates))

    ig = gates['input_gate_activations'].astype(jnp.float32)
    rg = gates['reset_gate_activations'].astype(jnp.float32)

    # Check against a bf16-quantized reference (same matmul precision).
    qo, qhy, qig, qrg = _reference_bf16(inp, hidden, w_ih, w_hh, b_ih, b_hh, num_layers)
    assert jnp.allclose(output, qo, atol=5e-3, rtol=5e-3)
    assert jnp.allclose(hy, qhy, atol=5e-3, rtol=5e-3)
    assert jnp.allclose(ig, qig, atol=1e-2, rtol=1e-2)   # gates stored in bf16
    assert jnp.allclose(rg, qrg, atol=1e-2, rtol=1e-2)

    # And against the full-f32 reference with bf16-appropriate tolerance.
    fo, fhy, fig, frg = _reference_f32(inp, hidden, w_ih, w_hh, b_ih, b_hh, num_layers)
    assert jnp.allclose(output, fo, atol=2e-2, rtol=2e-2)
    assert jnp.allclose(hy, fhy, atol=2e-2, rtol=2e-2)
    assert jnp.allclose(ig, fig, atol=2e-2, rtol=2e-2)
    assert jnp.allclose(rg, frg, atol=2e-2, rtol=2e-2)

    print("KERNEL_OK")
</pallas_src>

<mosaic_0001>
module attributes {stable_mosaic.version = 11 : i64} {
  func.func @_gru_cell_kernel(%arg0: i32, %arg1: memref<16x128xbf16, #tpu.memory_space<vmem>>, %arg2: memref<16x128xf32, #tpu.memory_space<vmem>>, %arg3: memref<128x384xbf16, #tpu.memory_space<vmem>>, %arg4: memref<128x384xbf16, #tpu.memory_space<vmem>>, %arg5: memref<1x384xf32, #tpu.memory_space<vmem>>, %arg6: memref<1x384xf32, #tpu.memory_space<vmem>>, %arg7: memref<16x128xf32, #tpu.memory_space<vmem>>, %arg8: memref<16x128xbf16, #tpu.memory_space<vmem>>, %arg9: memref<16x128xbf16, #tpu.memory_space<vmem>>) attributes {dimension_semantics = [#tpu.dimension_semantics<parallel>], iteration_bounds = array<i64: 1>, scalar_prefetch = 0 : i64, scratch_operands = 0 : i64, tpu.core_type = #tpu.core_type<tc>, window_params = [{transform_indices = @transform_0, window_bounds = array<i64: 16, 128>}, {transform_indices = @transform_1, window_bounds = array<i64: 16, 128>}, {pipeline_mode = #tpu.pipeline_mode<synchronous>, transform_indices = @transform_2, window_bounds = array<i64: 128, 384>}, {pipeline_mode = #tpu.pipeline_mode<synchronous>, transform_indices = @transform_3, window_bounds = array<i64: 128, 384>}, {pipeline_mode = #tpu.pipeline_mode<synchronous>, transform_indices = @transform_4, window_bounds = array<i64: 1, 384>}, {pipeline_mode = #tpu.pipeline_mode<synchronous>, transform_indices = @transform_5, window_bounds = array<i64: 1, 384>}, {transform_indices = @transform_6, window_bounds = array<i64: 16, 128>}, {transform_indices = @transform_7, window_bounds = array<i64: 16, 128>}, {transform_indices = @transform_8, window_bounds = array<i64: 16, 128>}]} {
    %c0 = arith.constant 0 : index
    %c0_0 = arith.constant 0 : index
    %0 = vector.load %arg1[%c0, %c0_0] : memref<16x128xbf16, #tpu.memory_space<vmem>>, vector<16x128xbf16>
    %c0_1 = arith.constant 0 : index
    %c0_2 = arith.constant 0 : index
    %1 = vector.load %arg2[%c0_1, %c0_2] : memref<16x128xf32, #tpu.memory_space<vmem>>, vector<16x128xf32>
    %c0_3 = arith.constant 0 : index
    %c0_4 = arith.constant 0 : index
    %2 = vector.load %arg3[%c0_3, %c0_4] : memref<128x384xbf16, #tpu.memory_space<vmem>>, vector<128x384xbf16>
    %cst = arith.constant dense<0.000000e+00> : vector<16x384xf32>
    %3 = tpu.matmul %0, %2, %cst {dimension_numbers = #tpu.dot_dimension_numbers<[1], [0], [0], [1], [0, 0, 1, 1], [], []>} : vector<16x128xbf16>, vector<128x384xbf16>, vector<16x384xf32> -> vector<16x384xf32>
    %c0_5 = arith.constant 0 : index
    %c0_6 = arith.constant 0 : index
    %4 = vector.load %arg5[%c0_5, %c0_6] : memref<1x384xf32, #tpu.memory_space<vmem>>, vector<1x384xf32>
    %5 = vector.broadcast %4 : vector<1x384xf32> to vector<16x384xf32>
    %6 = arith.addf %3, %5 : vector<16x384xf32>
    %7 = arith.truncf %1 : vector<16x128xf32> to vector<16x128xbf16>
    %c0_7 = arith.constant 0 : index
    %c0_8 = arith.constant 0 : index
    %8 = vector.load %arg4[%c0_7, %c0_8] : memref<128x384xbf16, #tpu.memory_space<vmem>>, vector<128x384xbf16>
    %cst_9 = arith.constant dense<0.000000e+00> : vector<16x384xf32>
    %9 = tpu.matmul %7, %8, %cst_9 {dimension_numbers = #tpu.dot_dimension_numbers<[1], [0], [0], [1], [0, 0, 1, 1], [], []>} : vector<16x128xbf16>, vector<128x384xbf16>, vector<16x384xf32> -> vector<16x384xf32>
    %c0_10 = arith.constant 0 : index
    %c0_11 = arith.constant 0 : index
    %10 = vector.load %arg6[%c0_10, %c0_11] : memref<1x384xf32, #tpu.memory_space<vmem>>, vector<1x384xf32>
    %11 = vector.broadcast %10 : vector<1x384xf32> to vector<16x384xf32>
    %12 = arith.addf %9, %11 : vector<16x384xf32>
    %13 = vector.extract_strided_slice %6 {offsets = [0, 0], sizes = [16, 128], strides = [1, 1]} : vector<16x384xf32> to vector<16x128xf32>
    %14 = vector.extract_strided_slice %6 {offsets = [0, 128], sizes = [16, 128], strides = [1, 1]} : vector<16x384xf32> to vector<16x128xf32>
    %15 = vector.extract_strided_slice %6 {offsets = [0, 256], sizes = [16, 128], strides = [1, 1]} : vector<16x384xf32> to vector<16x128xf32>
    %16 = vector.extract_strided_slice %12 {offsets = [0, 0], sizes = [16, 128], strides = [1, 1]} : vector<16x384xf32> to vector<16x128xf32>
    %17 = vector.extract_strided_slice %12 {offsets = [0, 128], sizes = [16, 128], strides = [1, 1]} : vector<16x384xf32> to vector<16x128xf32>
    %18 = vector.extract_strided_slice %12 {offsets = [0, 256], sizes = [16, 128], strides = [1, 1]} : vector<16x384xf32> to vector<16x128xf32>
    %19 = arith.addf %13, %16 : vector<16x128xf32>
    %20 = arith.negf %19 : vector<16x128xf32>
    %21 = math.exp %20 : vector<16x128xf32>
    %cst_12 = arith.constant 1.000000e+00 : f32
    %22 = vector.broadcast %cst_12 : f32 to vector<16x128xf32>
    %23 = arith.addf %22, %21 : vector<16x128xf32>
    %24 = arith.divf %22, %23 : vector<16x128xf32>
    %25 = arith.addf %14, %17 : vector<16x128xf32>
    %26 = arith.negf %25 : vector<16x128xf32>
    %27 = math.exp %26 : vector<16x128xf32>
    %cst_13 = arith.constant 1.000000e+00 : f32
    %28 = vector.broadcast %cst_13 : f32 to vector<16x128xf32>
    %29 = arith.addf %28, %27 : vector<16x128xf32>
    %30 = arith.divf %28, %29 : vector<16x128xf32>
    %31 = arith.mulf %24, %18 : vector<16x128xf32>
    %32 = arith.addf %15, %31 : vector<16x128xf32>
    %33 = math.tanh %32 : vector<16x128xf32>
    %34 = arith.subf %1, %33 : vector<16x128xf32>
    %35 = arith.mulf %30, %34 : vector<16x128xf32>
    %36 = arith.addf %33, %35 : vector<16x128xf32>
    %c0_14 = arith.constant 0 : index
    %c0_15 = arith.constant 0 : index
    %37 = vector.load %arg7[%c0_14, %c0_15] : memref<16x128xf32, #tpu.memory_space<vmem>>, vector<16x128xf32>
    tpu.vector_store %arg7[%c0_14, %c0_15], %36 {strides = array<i32>} : memref<16x128xf32, #tpu.memory_space<vmem>>, vector<16x128xf32>,
    %38 = arith.truncf %30 : vector<16x128xf32> to vector<16x128xbf16>
    %c0_16 = arith.constant 0 : index
    %c0_17 = arith.constant 0 : index
    %39 = vector.load %arg8[%c0_16, %c0_17] : memref<16x128xbf16, #tpu.memory_space<vmem>>, vector<16x128xbf16>
    tpu.vector_store %arg8[%c0_16, %c0_17], %38 {strides = array<i32>} : memref<16x128xbf16, #tpu.memory_space<vmem>>, vector<16x128xbf16>,
    %40 = arith.truncf %24 : vector<16x128xf32> to vector<16x128xbf16>
    %c0_18 = arith.constant 0 : index
    %c0_19 = arith.constant 0 : index
    %41 = vector.load %arg9[%c0_18, %c0_19] : memref<16x128xbf16, #tpu.memory_space<vmem>>, vector<16x128xbf16>
    tpu.vector_store %arg9[%c0_18, %c0_19], %40 {strides = array<i32>} : memref<16x128xbf16, #tpu.memory_space<vmem>>, vector<16x128xbf16>,
    return
  }
  func.func @transform_0(%arg0: i32) -> (i32, i32) {
    %c0_i32 = arith.constant 0 : i32
    %c0_i32_0 = arith.constant 0 : i32
    return %arg0, %c0_i32 : i32, i32
  }
  func.func @transform_1(%arg0: i32) -> (i32, i32) {
    %c0_i32 = arith.constant 0 : i32
    %c0_i32_0 = arith.constant 0 : i32
    return %arg0, %c0_i32 : i32, i32
  }
  func.func @transform_2(%arg0: i32) -> (i32, i32) {
    %c0_i32 = arith.constant 0 : i32
    %c0_i32_0 = arith.constant 0 : i32
    %c0_i32_1 = arith.constant 0 : i32
    return %c0_i32, %c0_i32_0 : i32, i32
  }
  func.func @transform_3(%arg0: i32) -> (i32, i32) {
    %c0_i32 = arith.constant 0 : i32
    %c0_i32_0 = arith.constant 0 : i32
    %c0_i32_1 = arith.constant 0 : i32
    return %c0_i32, %c0_i32_0 : i32, i32
  }
  func.func @transform_4(%arg0: i32) -> (i32, i32) {
    %c0_i32 = arith.constant 0 : i32
    %c0_i32_0 = arith.constant 0 : i32
    %c0_i32_1 = arith.constant 0 : i32
    return %c0_i32, %c0_i32_0 : i32, i32
  }
  func.func @transform_5(%arg0: i32) -> (i32, i32) {
    %c0_i32 = arith.constant 0 : i32
    %c0_i32_0 = arith.constant 0 : i32
    %c0_i32_1 = arith.constant 0 : i32
    return %c0_i32, %c0_i32_0 : i32, i32
  }
  func.func @transform_6(%arg0: i32) -> (i32, i32) {
    %c0_i32 = arith.constant 0 : i32
    %c0_i32_0 = arith.constant 0 : i32
    return %arg0, %c0_i32 : i32, i32
  }
  func.func @transform_7(%arg0: i32) -> (i32, i32) {
    %c0_i32 = arith.constant 0 : i32
    %c0_i32_0 = arith.constant 0 : i32
    return %arg0, %c0_i32 : i32, i32
  }
  func.func @transform_8(%arg0: i32) -> (i32, i32) {
    %c0_i32 = arith.constant 0 : i32
    %c0_i32_0 = arith.constant 0 : i32
    return %arg0, %c0_i32 : i32, i32
  }
}

</mosaic_0001>

<llo_original>
// kernel: tpu_custom_call.1
$region0: #{tpu_custom_call.1}
  #allocation0 [shape = 'u32[]', space=smem, size = 0x4, offset = 0x4, fixed_abs, tag = 'smem constant byte address 0x4 - core index']
  #allocation1 [shape = 'u32[144,128]{1,0:T(1,128)}', space=vmem, size = 0x12000, scoped, tag = 'internal scratch']
  %s0 = inlined_call_operand.hbm [shape: bf16[16,128], index: 0, kind: input, shape index: {}]
  %s1 = inlined_call_operand.hbm [shape: f32[16,128], index: 1, kind: input, shape index: {}]
  %s2 = inlined_call_operand.hbm [shape: bf16[128,384], index: 2, kind: input, shape index: {}]
  %s3 = inlined_call_operand.hbm [shape: bf16[128,384], index: 3, kind: input, shape index: {}]
  %s4 = inlined_call_operand.vmem [shape: f32[1,384], index: 4, kind: input, shape index: {}]
  %s5 = inlined_call_operand.vmem [shape: f32[1,384], index: 5, kind: input, shape index: {}]
  %s6 = inlined_call_operand.hbm [shape: f32[16,128], index: 6, kind: output, shape index: {0}]
  %s7 = inlined_call_operand.hbm [shape: bf16[16,128], index: 7, kind: output, shape index: {1}]
  %s8 = inlined_call_operand.hbm [shape: bf16[16,128], index: 8, kind: output, shape index: {2}]
  %9 = xla_tuple %s6, %s7, %s8
  %s10 = sld [smem:[#allocation0]]
  $region66: #{tpu_custom_call.1} parent=0
    _
  %s12 = ssub.s32 1, %s10
  %s13 = scalar_select 0, %s12, %s10
  $region1: #{tpu_custom_call.1} parent=0
    #allocation2 [shape = 'u8[4096]{0}', space=vmem, size = 0x1000, scoped, tag = 'input window, operand 0, single buffered']
    #allocation3 [shape = 's32[1]{0}', space=sflag, size = 0x4, scoped, tag = 'scoped memory for tpu_custom_call.1']
    #allocation4 [shape = 's32[1]{0}', space=sflag, size = 0x4, scoped, tag = 'scoped memory for tpu_custom_call.1']
    #allocation5 [shape = 'u8[8192]{0}', space=vmem, size = 0x2000, scoped, tag = 'input window, operand 1, single buffered']
    #allocation6 [shape = 's32[1]{0}', space=sflag, size = 0x4, scoped, tag = 'scoped memory for tpu_custom_call.1']
    #allocation7 [shape = 'u8[98304]{0}', space=vmem, size = 0x18000, scoped, tag = 'input window, operand 2, single buffered']
    #allocation8 [shape = 'u8[98304]{0}', space=vmem, size = 0x18000, scoped, tag = 'input window, operand 3, single buffered']
    #allocation9 [shape = 's32[1]{0}', space=sflag, size = 0x4, scoped, tag = 'scoped memory for tpu_custom_call.1']
    #allocation10 [shape = 'u8[8192]{0}', space=vmem, size = 0x2000, scoped, tag = 'output window, operand 0, single buffered']
    #allocation11 [shape = 'u8[4096]{0}', space=vmem, size = 0x1000, scoped, tag = 'output window, operand 1, single buffered']
    #allocation12 [shape = 's32[1]{0}', space=sflag, size = 0x4, scoped, tag = 'scoped memory for tpu_custom_call.1']
    #allocation13 [shape = 'u8[4096]{0}', space=vmem, size = 0x1000, scoped, tag = 'output window, operand 2, single buffered']
    %14 = vsyncpa [#allocation3], 0
    %15 = vsyncpa [#allocation6], 0
    %16 = vsyncpa [#allocation9], 0
    %17 = vsyncpa [#allocation4], 0
    %18 = vsyncpa [#allocation12], 0
    // Predicated region
    $region2: #{tpu_custom_call.1} parent=1 // pred_check
      _
    $region3: #{tpu_custom_call.1} parent=1 // pred_check_branch
      %20 = sbr.rel (0) target = $region5
    $region4: #{tpu_custom_call.1} parent=1 // pred_region
      %s22 = ssub.s32 128, 128
      %23 = vsyncadd [#allocation3], %s22
      %s24 = sshll.u32 [#allocation2], 4
      %s25 = int_to_ptr.vmem [resolvable:$true] %s24
      %30 = dma.hbm_to_vmem [thread:$0]  %s0, 128, %s25, [#allocation3], 64, 64, 4
    $region5: #{tpu_custom_call.1} parent=1 // pred_fallthru
      _
    // Predicated region
    $region6: #{tpu_custom_call.1} parent=1 // pred_check
      _
    $region7: #{tpu_custom_call.1} parent=1 // pred_check_branch
      %32 = sbr.rel (0) target = $region9
    $region8: #{tpu_custom_call.1} parent=1 // pred_region
      %s34 = ssub.s32 256, 256
      %35 = vsyncadd [#allocation6], %s34
      %s36 = sshll.u32 [#allocation5], 4
      %s37 = int_to_ptr.vmem [resolvable:$true] %s36
      %42 = dma.hbm_to_vmem [thread:$0]  %s1, 256, %s37, [#allocation6], 128, 128, 8
    $region9: #{tpu_custom_call.1} parent=1 // pred_fallthru
      _
    // Predicated region
    $region10: #{tpu_custom_call.1} parent=1 // pred_check
      _
    $region11: #{tpu_custom_call.1} parent=1 // pred_check_branch
      %44 = sbr.rel (0) target = $region13
    $region12: #{tpu_custom_call.1} parent=1 // pred_region
      %s46 = ssub.s32 3072, 3072
      %47 = vsyncadd [#allocation6], %s46
      %s48 = sshll.u32 [#allocation7], 4
      %s49 = int_to_ptr.vmem [resolvable:$true] %s48
      %54 = dma.hbm_to_vmem [thread:$0]  %s2, 3072, %s49, [#allocation6], 192, 192, 12
    $region13: #{tpu_custom_call.1} parent=1 // pred_fallthru
      _
    // Predicated region
    $region14: #{tpu_custom_call.1} parent=1 // pred_check
      _
    $region15: #{tpu_custom_call.1} parent=1 // pred_check_branch
      %56 = sbr.rel (0) target = $region17
    $region16: #{tpu_custom_call.1} parent=1 // pred_region
      %s58 = ssub.s32 3072, 3072
      %59 = vsyncadd [#allocation9], %s58
      %s60 = sshll.u32 [#allocation8], 4
      %s61 = int_to_ptr.vmem [resolvable:$true] %s60
      %66 = dma.hbm_to_vmem [thread:$0]  %s3, 3072, %s61, [#allocation9], 192, 192, 12
    $region17: #{tpu_custom_call.1} parent=1 // pred_fallthru
      _
    // Predicated region
    $region18: #{tpu_custom_call.1} parent=1 // pred_check
      _
    $region19: #{tpu_custom_call.1} parent=1 // pred_check_branch
      %68 = sbr.rel (0) target = $region21
    $region20: #{tpu_custom_call.1} parent=1 // pred_region
      _
    $region21: #{tpu_custom_call.1} parent=1 // pred_fallthru
      _
    // Predicated region
    $region22: #{tpu_custom_call.1} parent=1 // pred_check
      _
    $region23: #{tpu_custom_call.1} parent=1 // pred_check_branch
      %70 = sbr.rel (0) target = $region25
    $region24: #{tpu_custom_call.1} parent=1 // pred_region
      _
    $region25: #{tpu_custom_call.1} parent=1 // pred_fallthru
      _
    // Predicated region
    $region26: #{tpu_custom_call.1} parent=1 // pred_check
      _
    $region27: #{tpu_custom_call.1} parent=1 // pred_check_branch
      %72 = sbr.rel (0) target = $region29
    $region28: #{tpu_custom_call.1} parent=1 // pred_region
      %73 = dma.done [#allocation3], 128
    $region29: #{tpu_custom_call.1} parent=1 // pred_fallthru
      _
    // Predicated region
    $region30: #{tpu_custom_call.1} parent=1 // pred_check
      _
    $region31: #{tpu_custom_call.1} parent=1 // pred_check_branch
      %75 = sbr.rel (0) target = $region33
    $region32: #{tpu_custom_call.1} parent=1 // pred_region
      %76 = dma.done [#allocation6], 256
    $region33: #{tpu_custom_call.1} parent=1 // pred_fallthru
      _
    // Predicated region
    $region34: #{tpu_custom_call.1} parent=1 // pred_check
      _
    $region35: #{tpu_custom_call.1} parent=1 // pred_check_branch
      %78 = sbr.rel (0) target = $region37
    $region36: #{tpu_custom_call.1} parent=1 // pred_region
      %79 = dma.done [#allocation6], 3072
    $region37: #{tpu_custom_call.1} parent=1 // pred_fallthru
      _
    // Predicated region
    $region38: #{tpu_custom_call.1} parent=1 // pred_check
      _
    $region39: #{tpu_custom_call.1} parent=1 // pred_check_branch
      %81 = sbr.rel (0) target = $region41
    $region40: #{tpu_custom_call.1} parent=1 // pred_region
      %82 = dma.done [#allocation9], 3072
    $region41: #{tpu_custom_call.1} parent=1 // pred_fallthru
      _
    %v84 = vld [vmem:[#allocation2] sm:$0xf]
    %v85 = vld [vmem:[#allocation2 + $0x4] sm:$0xf]
    %v86 = vld [vmem:[#allocation5] sm:$0xff]
    %v87 = vld [vmem:[#allocation5 + $0x8] sm:$0xff]
    %v88 = vld [vmem:[#allocation7] sm:$0xff]
    %v89 = vld [vmem:[#allocation7 + $0x8] sm:$0xf]
    %v90 = vld [vmem:[#allocation7 + $0xc] sm:$0xff]
    %v91 = vld [vmem:[#allocation7 + $0x14] sm:$0xf]
    %v92 = vld [vmem:[#allocation7 + $0x18] sm:$0xff]
    %v93 = vld [vmem:[#allocation7 + $0x20] sm:$0xf]
    %v94 = vld [vmem:[#allocation7 + $0x24] sm:$0xff]
    %v95 = vld [vmem:[#allocation7 + $0x2c] sm:$0xf]
    %v96 = vld [vmem:[#allocation7 + $0x30] sm:$0xff]
    %v97 = vld [vmem:[#allocation7 + $0x38] sm:$0xf]
    %v98 = vld [vmem:[#allocation7 + $0x3c] sm:$0xff]
    %v99 = vld [vmem:[#allocation7 + $0x44] sm:$0xf]
    %v100 = vld [vmem:[#allocation7 + $0x48] sm:$0xff]
    %v101 = vld [vmem:[#allocation7 + $0x50] sm:$0xf]
    %v102 = vld [vmem:[#allocation7 + $0x54] sm:$0xff]
    %v103 = vld [vmem:[#allocation7 + $0x5c] sm:$0xf]
    %v104 = vld [vmem:[#allocation7 + $0x60] sm:$0xff]
    %v105 = vld [vmem:[#allocation7 + $0x68] sm:$0xf]
    %v106 = vld [vmem:[#allocation7 + $0x6c] sm:$0xff]
    %v107 = vld [vmem:[#allocation7 + $0x74] sm:$0xf]
    %v108 = vld [vmem:[#allocation7 + $0x78] sm:$0xff]
    %v109 = vld [vmem:[#allocation7 + $0x80] sm:$0xf]
    %v110 = vld [vmem:[#allocation7 + $0x84] sm:$0xff]
    %v111 = vld [vmem:[#allocation7 + $0x8c] sm:$0xf]
    %v112 = vld [vmem:[#allocation7 + $0x90] sm:$0xff]
    %v113 = vld [vmem:[#allocation7 + $0x98] sm:$0xf]
    %v114 = vld [vmem:[#allocation7 + $0x9c] sm:$0xff]
    %v115 = vld [vmem:[#allocation7 + $0xa4] sm:$0xf]
    %v116 = vld [vmem:[#allocation7 + $0xa8] sm:$0xff]
    %v117 = vld [vmem:[#allocation7 + $0xb0] sm:$0xf]
    %v118 = vld [vmem:[#allocation7 + $0xb4] sm:$0xff]
    %v119 = vld [vmem:[#allocation7 + $0xbc] sm:$0xf]
    %v120 = vld [vmem:[%s4] sm:$0x7]
    %v122 = vlaneseq
    %v123 = vshrl.u32 %v122, 7
    %v124 = vsub.s32 0, %v123
    %v125 = vrot.slane %v120, %v124
    %v126 = vlaneseq
    %v127 = vshrl.u32 %v126, 7
    %v128 = vsub.s32 1, %v127
    %v129 = vrot.slane %v120, %v128
    %v130 = vlaneseq
    %v131 = vshrl.u32 %v130, 7
    %v132 = vsub.s32 2, %v131
    %v133 = vrot.slane %v120, %v132
    %v139 = vunpack.c.l.b16 %v84
    %v140 = vunpack.c.l.b16 %v85
    %v141 = vpack.c.b16 %v140, %v139
    %v175 = vunpack.c.l.b16 %v88
    %v176 = vunpack.c.h.b16 %v88
    %v177 = vunpack.c.l.b16 %v89
    %v178 = vunpack.c.l.b16 %v90
    %v179 = vunpack.c.h.b16 %v90
    %v180 = vunpack.c.l.b16 %v91
    %v181 = vunpack.c.l.b16 %v92
    %v182 = vunpack.c.h.b16 %v92
    %v183 = vunpack.c.l.b16 %v93
    %v184 = vunpack.c.l.b16 %v94
    %v185 = vunpack.c.h.b16 %v94
    %v186 = vunpack.c.l.b16 %v95
    %v187 = vunpack.c.l.b16 %v96
    %v188 = vunpack.c.h.b16 %v96
    %v189 = vunpack.c.l.b16 %v97
    %v190 = vunpack.c.l.b16 %v98
    %v191 = vunpack.c.h.b16 %v98
    %v192 = vunpack.c.l.b16 %v99
    %v193 = vunpack.c.l.b16 %v100
    %v194 = vunpack.c.h.b16 %v100
    %v195 = vunpack.c.l.b16 %v101
    %v196 = vunpack.c.l.b16 %v102
    %v197 = vunpack.c.h.b16 %v102
    %v198 = vunpack.c.l.b16 %v103
    %v199 = vunpack.c.l.b16 %v104
    %v200 = vunpack.c.h.b16 %v104
    %v201 = vunpack.c.l.b16 %v105
    %v202 = vunpack.c.l.b16 %v106
    %v203 = vunpack.c.h.b16 %v106
    %v204 = vunpack.c.l.b16 %v107
    %v205 = vunpack.c.l.b16 %v108
    %v206 = vunpack.c.h.b16 %v108
    %v207 = vunpack.c.l.b16 %v109
    %v208 = vunpack.c.l.b16 %v110
    %v209 = vunpack.c.h.b16 %v110
    %v210 = vunpack.c.l.b16 %v111
    %v211 = vunpack.c.l.b16 %v112
    %v212 = vunpack.c.h.b16 %v112
    %v213 = vunpack.c.l.b16 %v113
    %v214 = vunpack.c.l.b16 %v114
    %v215 = vunpack.c.h.b16 %v114
    %v216 = vunpack.c.l.b16 %v115
    %v217 = vunpack.c.l.b16 %v116
    %v218 = vunpack.c.h.b16 %v116
    %v219 = vunpack.c.l.b16 %v117
    %v220 = vunpack.c.l.b16 %v118
    %v221 = vunpack.c.h.b16 %v118
    %v222 = vunpack.c.l.b16 %v119
    %v223 = vpack.c.b16 %v178, %v175
    %v224 = vpack.c.b16 %v179, %v176
    %v225 = vpack.c.b16 %v180, %v177
    %v226 = vpack.c.b16 %v184, %v181
    %v227 = vpack.c.b16 %v185, %v182
    %v228 = vpack.c.b16 %v186, %v183
    %v229 = vpack.c.b16 %v190, %v187
    %v230 = vpack.c.b16 %v191, %v188
    %v231 = vpack.c.b16 %v192, %v189
    %v232 = vpack.c.b16 %v196, %v193
    %v233 = vpack.c.b16 %v197, %v194
    %v234 = vpack.c.b16 %v198, %v195
    %v235 = vpack.c.b16 %v202, %v199
    %v236 = vpack.c.b16 %v203, %v200
    %v237 = vpack.c.b16 %v204, %v201
    %v238 = vpack.c.b16 %v208, %v205
    %v239 = vpack.c.b16 %v209, %v206
    %v240 = vpack.c.b16 %v210, %v207
    %v241 = vpack.c.b16 %v214, %v211
    %v242 = vpack.c.b16 %v215, %v212
    %v243 = vpack.c.b16 %v216, %v213
    %v244 = vpack.c.b16 %v220, %v217
    %v245 = vpack.c.b16 %v221, %v218
    %v246 = vpack.c.b16 %v222, %v219
    %271 = vmatprep.subr.bf16.mxu0 %v224
    %272 = vmatpush1.bf16.msra.mxu0 %v223
    %273 = vmatprep.subr.bf16.mxu0 %v227
    %274 = vmatpush1.bf16.msra.mxu0 %v226
    %275 = vmatprep.subr.bf16.mxu0 %v230
    %276 = vmatpush1.bf16.msra.mxu0 %v229
    %277 = vmatprep.subr.bf16.mxu0 %v233
    %278 = vmatpush1.bf16.msra.mxu0 %v232
    %279 = vmatprep.subr.bf16.mxu0 %v236
    %280 = vmatpush1.bf16.msra.mxu0 %v235
    %281 = vmatprep.subr.bf16.mxu0 %v239
    %282 = vmatpush1.bf16.msra.mxu0 %v238
    %283 = vmatprep.subr.bf16.mxu0 %v242
    %284 = vmatpush1.bf16.msra.mxu0 %v241
    %285 = vmatprep.subr.bf16.mxu0 %v245
    %286 = vmatpush1.bf16.msra.mxu0 %v244
    %287 = vmatprep.subr.bf16.mxu0 0
    %288 = vmatpush1.bf16.msra.mxu0 0
    %289 = vmatprep.subr.bf16.mxu0 0
    %290 = vmatpush1.bf16.msra.mxu0 0
    %291 = vmatprep.subr.bf16.mxu0 0
    %292 = vmatpush1.bf16.msra.mxu0 0
    %293 = vmatprep.subr.bf16.mxu0 0
    %294 = vmatpush1.bf16.msra.mxu0 0
    %295 = vmatprep.subr.bf16.mxu0 0
    %296 = vmatpush1.bf16.msra.mxu0 0
    %297 = vmatprep.subr.bf16.mxu0 0
    %298 = vmatpush1.bf16.msra.mxu0 0
    %299 = vmatprep.subr.bf16.mxu0 0
    %300 = vmatpush1.bf16.msra.mxu0 0
    %301 = vmatprep.subr.bf16.mxu0 0
    %302 = vmatpush1.bf16.msra.mxu0 0
    %303 = vmatprep.mubr.bf16.mxu0 0
    %304 = vmatmul.mubr.bf16.gmra.mrb[0].mxu0 %v141
    %v305 = vpop.f32.mrb[0].mxu0
    %v306 = vadd.f32 %v125, %v305
    %v307 = vpop.f32.mrb[0].mxu0
    %v308 = vadd.f32 %v129, %v307
    %v309 = vpop.f32.mrb[0].mxu0
    %v310 = vadd.f32 %v125, %v309
    %v311 = vpop.f32.mrb[0].mxu0
    %v312 = vadd.f32 %v129, %v311
    %313 = vdwg.mxu0
    %314 = vmatprep.subr.bf16.mxu0 0
    %315 = vmatpush1.bf16.msra.mxu0 %v225
    %316 = vmatprep.subr.bf16.mxu0 0
    %317 = vmatpush1.bf16.msra.mxu0 %v228
    %318 = vmatprep.subr.bf16.mxu0 0
    %319 = vmatpush1.bf16.msra.mxu0 %v231
    %320 = vmatprep.subr.bf16.mxu0 0
    %321 = vmatpush1.bf16.msra.mxu0 %v234
    %322 = vmatprep.subr.bf16.mxu0 0
    %323 = vmatpush1.bf16.msra.mxu0 %v237
    %324 = vmatprep.subr.bf16.mxu0 0
    %325 = vmatpush1.bf16.msra.mxu0 %v240
    %326 = vmatprep.subr.bf16.mxu0 0
    %327 = vmatpush1.bf16.msra.mxu0 %v243
    %328 = vmatprep.subr.bf16.mxu0 0
    %329 = vmatpush1.bf16.msra.mxu0 %v246
    %330 = vmatprep.subr.bf16.mxu0 0
    %331 = vmatpush1.bf16.msra.mxu0 0
    %332 = vmatprep.subr.bf16.mxu0 0
    %333 = vmatpush1.bf16.msra.mxu0 0
    %334 = vmatprep.subr.bf16.mxu0 0
    %335 = vmatpush1.bf16.msra.mxu0 0
    %336 = vmatprep.subr.bf16.mxu0 0
    %337 = vmatpush1.bf16.msra.mxu0 0
    %338 = vmatprep.subr.bf16.mxu0 0
    %339 = vmatpush1.bf16.msra.mxu0 0
    %340 = vmatprep.subr.bf16.mxu0 0
    %341 = vmatpush1.bf16.msra.mxu0 0
    %342 = vmatprep.subr.bf16.mxu0 0
    %343 = vmatpush1.bf16.msra.mxu0 0
    %344 = vmatprep.subr.bf16.mxu0 0
    %345 = vmatpush1.bf16.msra.mxu0 0
    %346 = vmatprep.mubr.bf16.mxu0 0
    %347 = vmatmul.mubr.bf16.gmra.mrb[0].mxu0 %v141
    %v348 = vpop.f32.mrb[0].mxu0
    %v349 = vadd.f32 %v133, %v348
    %v350 = vpop.f32.mrb[0].mxu0
    %v351 = vpop.f32.mrb[0].mxu0
    %v352 = vadd.f32 %v133, %v351
    %v353 = vpop.f32.mrb[0].mxu0
    %354 = vdwg.mxu0
    %v355 = vpack.c.bf16 %v87, %v86
    %v356 = vld [vmem:[#allocation8] sm:$0xff]
    %v357 = vld [vmem:[#allocation8 + $0x8] sm:$0xf]
    %v358 = vld [vmem:[#allocation8 + $0xc] sm:$0xff]
    %v359 = vld [vmem:[#allocation8 + $0x14] sm:$0xf]
    %v360 = vld [vmem:[#allocation8 + $0x18] sm:$0xff]
    %v361 = vld [vmem:[#allocation8 + $0x20] sm:$0xf]
    %v362 = vld [vmem:[#allocation8 + $0x24] sm:$0xff]
    %v363 = vld [vmem:[#allocation8 + $0x2c] sm:$0xf]
    %v364 = vld [vmem:[#allocation8 + $0x30] sm:$0xff]
    %v365 = vld [vmem:[#allocation8 + $0x38] sm:$0xf]
    %v366 = vld [vmem:[#allocation8 + $0x3c] sm:$0xff]
    %v367 = vld [vmem:[#allocation8 + $0x44] sm:$0xf]
    %v368 = vld [vmem:[#allocation8 + $0x48] sm:$0xff]
    %v369 = vld [vmem:[#allocation8 + $0x50] sm:$0xf]
    %v370 = vld [vmem:[#allocation8 + $0x54] sm:$0xff]
    %v371 = vld [vmem:[#allocation8 + $0x5c] sm:$0xf]
    %v372 = vld [vmem:[#allocation8 + $0x60] sm:$0xff]
    %v373 = vld [vmem:[#allocation8 + $0x68] sm:$0xf]
    %v374 = vld [vmem:[#allocation8 + $0x6c] sm:$0xff]
    %v375 = vld [vmem:[#allocation8 + $0x74] sm:$0xf]
    %v376 = vld [vmem:[#allocation8 + $0x78] sm:$0xff]
    %v377 = vld [vmem:[#allocation8 + $0x80] sm:$0xf]
    %v378 = vld [vmem:[#allocation8 + $0x84] sm:$0xff]
    %v379 = vld [vmem:[#allocation8 + $0x8c] sm:$0xf]
    %v380 = vld [vmem:[#allocation8 + $0x90] sm:$0xff]
    %v381 = vld [vmem:[#allocation8 + $0x98] sm:$0xf]
    %v382 = vld [vmem:[#allocation8 + $0x9c] sm:$0xff]
    %v383 = vld [vmem:[#allocation8 + $0xa4] sm:$0xf]
    %v384 = vld [vmem:[#allocation8 + $0xa8] sm:$0xff]
    %v385 = vld [vmem:[#allocation8 + $0xb0] sm:$0xf]
    %v386 = vld [vmem:[#allocation8 + $0xb4] sm:$0xff]
    %v387 = vld [vmem:[#allocation8 + $0xbc] sm:$0xf]
    %v388 = vld [vmem:[%s5] sm:$0x7]
    %v390 = vlaneseq
    %v391 = vshrl.u32 %v390, 7
    %v392 = vsub.s32 0, %v391
    %v393 = vrot.slane %v388, %v392
    %v394 = vlaneseq
    %v395 = vshrl.u32 %v394, 7
    %v396 = vsub.s32 1, %v395
    %v397 = vrot.slane %v388, %v396
    %v398 = vlaneseq
    %v399 = vshrl.u32 %v398, 7
    %v400 = vsub.s32 2, %v399
    %v401 = vrot.slane %v388, %v400
    %v437 = vunpack.c.l.b16 %v356
    %v438 = vunpack.c.h.b16 %v356
    %v439 = vunpack.c.l.b16 %v357
    %v440 = vunpack.c.l.b16 %v358
    %v441 = vunpack.c.h.b16 %v358
    %v442 = vunpack.c.l.b16 %v359
    %v443 = vunpack.c.l.b16 %v360
    %v444 = vunpack.c.h.b16 %v360
    %v445 = vunpack.c.l.b16 %v361
    %v446 = vunpack.c.l.b16 %v362
    %v447 = vunpack.c.h.b16 %v362
    %v448 = vunpack.c.l.b16 %v363
    %v449 = vunpack.c.l.b16 %v364
    %v450 = vunpack.c.h.b16 %v364
    %v451 = vunpack.c.l.b16 %v365
    %v452 = vunpack.c.l.b16 %v366
    %v453 = vunpack.c.h.b16 %v366
    %v454 = vunpack.c.l.b16 %v367
    %v455 = vunpack.c.l.b16 %v368
    %v456 = vunpack.c.h.b16 %v368
    %v457 = vunpack.c.l.b16 %v369
    %v458 = vunpack.c.l.b16 %v370
    %v459 = vunpack.c.h.b16 %v370
    %v460 = vunpack.c.l.b16 %v371
    %v461 = vunpack.c.l.b16 %v372
    %v462 = vunpack.c.h.b16 %v372
    %v463 = vunpack.c.l.b16 %v373
    %v464 = vunpack.c.l.b16 %v374
    %v465 = vunpack.c.h.b16 %v374
    %v466 = vunpack.c.l.b16 %v375
    %v467 = vunpack.c.l.b16 %v376
    %v468 = vunpack.c.h.b16 %v376
    %v469 = vunpack.c.l.b16 %v377
    %v470 = vunpack.c.l.b16 %v378
    %v471 = vunpack.c.h.b16 %v378
    %v472 = vunpack.c.l.b16 %v379
    %v473 = vunpack.c.l.b16 %v380
    %v474 = vunpack.c.h.b16 %v380
    %v475 = vunpack.c.l.b16 %v381
    %v476 = vunpack.c.l.b16 %v382
    %v477 = vunpack.c.h.b16 %v382
    %v478 = vunpack.c.l.b16 %v383
    %v479 = vunpack.c.l.b16 %v384
    %v480 = vunpack.c.h.b16 %v384
    %v481 = vunpack.c.l.b16 %v385
    %v482 = vunpack.c.l.b16 %v386
    %v483 = vunpack.c.h.b16 %v386
    %v484 = vunpack.c.l.b16 %v387
    %v485 = vpack.c.b16 %v440, %v437
    %v486 = vpack.c.b16 %v441, %v438
    %v487 = vpack.c.b16 %v442, %v439
    %v488 = vpack.c.b16 %v446, %v443
    %v489 = vpack.c.b16 %v447, %v444
    %v490 = vpack.c.b16 %v448, %v445
    %v491 = vpack.c.b16 %v452, %v449
    %v492 = vpack.c.b16 %v453, %v450
    %v493 = vpack.c.b16 %v454, %v451
    %v494 = vpack.c.b16 %v458, %v455
    %v495 = vpack.c.b16 %v459, %v456
    %v496 = vpack.c.b16 %v460, %v457
    %v497 = vpack.c.b16 %v464, %v461
    %v498 = vpack.c.b16 %v465, %v462
    %v499 = vpack.c.b16 %v466, %v463
    %v500 = vpack.c.b16 %v470, %v467
    %v501 = vpack.c.b16 %v471, %v468
    %v502 = vpack.c.b16 %v472, %v469
    %v503 = vpack.c.b16 %v476, %v473
    %v504 = vpack.c.b16 %v477, %v474
    %v505 = vpack.c.b16 %v478, %v475
    %v506 = vpack.c.b16 %v482, %v479
    %v507 = vpack.c.b16 %v483, %v480
    %v508 = vpack.c.b16 %v484, %v481
    %533 = vmatprep.subr.bf16.mxu0 %v486
    %534 = vmatpush1.bf16.msra.mxu0 %v485
    %535 = vmatprep.subr.bf16.mxu0 %v489
    %536 = vmatpush1.bf16.msra.mxu0 %v488
    %537 = vmatprep.subr.bf16.mxu0 %v492
    %538 = vmatpush1.bf16.msra.mxu0 %v491
    %539 = vmatprep.subr.bf16.mxu0 %v495
    %540 = vmatpush1.bf16.msra.mxu0 %v494
    %541 = vmatprep.subr.bf16.mxu0 %v498
    %542 = vmatpush1.bf16.msra.mxu0 %v497
    %543 = vmatprep.subr.bf16.mxu0 %v501
    %544 = vmatpush1.bf16.msra.mxu0 %v500
    %545 = vmatprep.subr.bf16.mxu0 %v504
    %546 = vmatpush1.bf16.msra.mxu0 %v503
    %547 = vmatprep.subr.bf16.mxu0 %v507
    %548 = vmatpush1.bf16.msra.mxu0 %v506
    %549 = vmatprep.subr.bf16.mxu0 0
    %550 = vmatpush1.bf16.msra.mxu0 0
    %551 = vmatprep.subr.bf16.mxu0 0
    %552 = vmatpush1.bf16.msra.mxu0 0
    %553 = vmatprep.subr.bf16.mxu0 0
    %554 = vmatpush1.bf16.msra.mxu0 0
    %555 = vmatprep.subr.bf16.mxu0 0
    %556 = vmatpush1.bf16.msra.mxu0 0
    %557 = vmatprep.subr.bf16.mxu0 0
    %558 = vmatpush1.bf16.msra.mxu0 0
    %559 = vmatprep.subr.bf16.mxu0 0
    %560 = vmatpush1.bf16.msra.mxu0 0
    %561 = vmatprep.subr.bf16.mxu0 0
    %562 = vmatpush1.bf16.msra.mxu0 0
    %563 = vmatprep.subr.bf16.mxu0 0
    %564 = vmatpush1.bf16.msra.mxu0 0
    %565 = vmatprep.mubr.bf16.mxu0 0
    %566 = vmatmul.mubr.bf16.gmra.mrb[0].mxu0 %v355
    %v567 = vpop.f32.mrb[0].mxu0
    %v568 = vadd.f32 %v393, %v567
    %v569 = vpop.f32.mrb[0].mxu0
    %v570 = vadd.f32 %v397, %v569
    %v571 = vpop.f32.mrb[0].mxu0
    %v572 = vadd.f32 %v393, %v571
    %v573 = vpop.f32.mrb[0].mxu0
    %v574 = vadd.f32 %v397, %v573
    %575 = vdwg.mxu0
    %576 = vmatprep.subr.bf16.mxu0 0
    %577 = vmatpush1.bf16.msra.mxu0 %v487
    %578 = vmatprep.subr.bf16.mxu0 0
    %579 = vmatpush1.bf16.msra.mxu0 %v490
    %580 = vmatprep.subr.bf16.mxu0 0
    %581 = vmatpush1.bf16.msra.mxu0 %v493
    %582 = vmatprep.subr.bf16.mxu0 0
    %583 = vmatpush1.bf16.msra.mxu0 %v496
    %584 = vmatprep.subr.bf16.mxu0 0
    %585 = vmatpush1.bf16.msra.mxu0 %v499
    %586 = vmatprep.subr.bf16.mxu0 0
    %587 = vmatpush1.bf16.msra.mxu0 %v502
    %588 = vmatprep.subr.bf16.mxu0 0
    %589 = vmatpush1.bf16.msra.mxu0 %v505
    %590 = vmatprep.subr.bf16.mxu0 0
    %591 = vmatpush1.bf16.msra.mxu0 %v508
    %592 = vmatprep.subr.bf16.mxu0 0
    %593 = vmatpush1.bf16.msra.mxu0 0
    %594 = vmatprep.subr.bf16.mxu0 0
    %595 = vmatpush1.bf16.msra.mxu0 0
    %596 = vmatprep.subr.bf16.mxu0 0
    %597 = vmatpush1.bf16.msra.mxu0 0
    %598 = vmatprep.subr.bf16.mxu0 0
    %599 = vmatpush1.bf16.msra.mxu0 0
    %600 = vmatprep.subr.bf16.mxu0 0
    %601 = vmatpush1.bf16.msra.mxu0 0
    %602 = vmatprep.subr.bf16.mxu0 0
    %603 = vmatpush1.bf16.msra.mxu0 0
    %604 = vmatprep.subr.bf16.mxu0 0
    %605 = vmatpush1.bf16.msra.mxu0 0
    %606 = vmatprep.subr.bf16.mxu0 0
    %607 = vmatpush1.bf16.msra.mxu0 0
    %608 = vmatprep.mubr.bf16.mxu0 0
    %609 = vmatmul.mubr.bf16.gmra.mrb[0].mxu0 %v355
    %v610 = vpop.f32.mrb[0].mxu0
    %v611 = vadd.f32 %v401, %v610
    %v612 = vpop.f32.mrb[0].mxu0
    %v613 = vpop.f32.mrb[0].mxu0
    %v614 = vadd.f32 %v401, %v613
    %v615 = vpop.f32.mrb[0].mxu0
    %616 = vdwg.mxu0
    %v617 = vadd.f32 %v306, %v568
    %v618 = vadd.f32 %v310, %v572
    %v619 = vxor.u32 %v617, 2147483648
    %v620 = vxor.u32 %v618, 2147483648
    %v621 = vmul.f32 %v619, 1.442695
    %v622 = vpow.pop %v621
    %v623 = vmul.f32 %v620, 1.442695
    %v624 = vpow.pop %v623
    %v625 = vadd.f32 %v622, 1.0
    %v626 = vadd.f32 %v624, 1.0
    %v627 = vrcp.pop %v625
    %v628 = vmul.f32 1.0, %v627
    %v629 = vrcp.pop %v626
    %v630 = vmul.f32 1.0, %v629
    %v631 = vadd.f32 %v308, %v570
    %v632 = vadd.f32 %v312, %v574
    %v633 = vxor.u32 %v631, 2147483648
    %v634 = vxor.u32 %v632, 2147483648
    %v635 = vmul.f32 %v633, 1.442695
    %v636 = vpow.pop %v635
    %v637 = vmul.f32 %v634, 1.442695
    %v638 = vpow.pop %v637
    %v639 = vadd.f32 %v636, 1.0
    %v640 = vadd.f32 %v638, 1.0
    %v641 = vrcp.pop %v639
    %v642 = vmul.f32 1.0, %v641
    %v643 = vrcp.pop %v640
    %v644 = vmul.f32 1.0, %v643
    %v645 = vmul.f32 %v628, %v611
    %v646 = vmul.f32 %v630, %v614
    %v647 = vadd.f32 %v349, %v645
    %v648 = vadd.f32 %v352, %v646
    %v649 = vtanh.pop %v647
    %v650 = vtanh.pop %v648
    %v651 = vsub.f32 %v86, %v649
    %v652 = vsub.f32 %v87, %v650
    %v653 = vmul.f32 %v642, %v651
    %v654 = vmul.f32 %v644, %v652
    %v655 = vadd.f32 %v649, %v653
    %v656 = vadd.f32 %v650, %v654
    %657 = vst [vmem:[#allocation10] sm:$0xff] %v655
    %658 = vst [vmem:[#allocation10 + $0x8] sm:$0xff] %v656
    %v659 = vpack.c.bf16 %v644, %v642
    %v661 = vunpack.c.l.b16 %v659
    %v662 = vunpack.c.h.b16 %v659
    %v663 = vpack.c.b16 %v661, %v661
    %v664 = vpack.c.b16 %v662, %v662
    %667 = vst [vmem:[#allocation11] sm:$0xf] %v663
    %668 = vst [vmem:[#allocation11 + $0x4] sm:$0xf] %v664
    %v669 = vpack.c.bf16 %v630, %v628
    %v671 = vunpack.c.l.b16 %v669
    %v672 = vunpack.c.h.b16 %v669
    %v673 = vpack.c.b16 %v671, %v671
    %v674 = vpack.c.b16 %v672, %v672
    %677 = vst [vmem:[#allocation13] sm:$0xf] %v673
    %678 = vst [vmem:[#allocation13 + $0x4] sm:$0xf] %v674
    // Predicated region
    $region42: #{tpu_custom_call.1} parent=1 // pred_check
      _
    $region43: #{tpu_custom_call.1} parent=1 // pred_check_branch
      %680 = sbr.rel (0) target = $region45
    $region44: #{tpu_custom_call.1} parent=1 // pred_region
      %s682 = ssub.s32 256, 256
      %683 = vsyncadd [#allocation4], %s682
      %s684 = sshll.u32 [#allocation10], 4
      %s685 = int_to_ptr.vmem [resolvable:$true] %s684
      %690 = dma.vmem_to_hbm [thread:$0]  %s685, 256, %s6, [#allocation4], 128, 128, 8
    $region45: #{tpu_custom_call.1} parent=1 // pred_fallthru
      _
    // Predicated region
    $region46: #{tpu_custom_call.1} parent=1 // pred_check
      _
    $region47: #{tpu_custom_call.1} parent=1 // pred_check_branch
      %692 = sbr.rel (0) target = $region49
    $region48: #{tpu_custom_call.1} parent=1 // pred_region
      %s694 = ssub.s32 128, 128
      %695 = vsyncadd [#allocation12], %s694
      %s696 = sshll.u32 [#allocation11], 4
      %s697 = int_to_ptr.vmem [resolvable:$true] %s696
      %702 = dma.vmem_to_hbm [thread:$0]  %s697, 128, %s7, [#allocation12], 64, 64, 4
    $region49: #{tpu_custom_call.1} parent=1 // pred_fallthru
      _
    // Predicated region
    $region50: #{tpu_custom_call.1} parent=1 // pred_check
      _
    $region51: #{tpu_custom_call.1} parent=1 // pred_check_branch
      %704 = sbr.rel (0) target = $region53
    $region52: #{tpu_custom_call.1} parent=1 // pred_region
      %s706 = ssub.s32 128, 128
      %707 = vsyncadd [#allocation12], %s706
      %s708 = sshll.u32 [#allocation13], 4
      %s709 = int_to_ptr.vmem [resolvable:$true] %s708
      %714 = dma.vmem_to_hbm [thread:$0]  %s709, 128, %s8, [#allocation12], 64, 64, 4
    $region53: #{tpu_custom_call.1} parent=1 // pred_fallthru
      _
    // Predicated region
    $region54: #{tpu_custom_call.1} parent=1 // pred_check
      _
    $region55: #{tpu_custom_call.1} parent=1 // pred_check_branch
      %716 = sbr.rel (0) target = $region57
    $region56: #{tpu_custom_call.1} parent=1 // pred_region
      %717 = dma.done [#allocation4], 256
    $region57: #{tpu_custom_call.1} parent=1 // pred_fallthru
      _
    // Predicated region
    $region58: #{tpu_custom_call.1} parent=1 // pred_check
      _
    $region59: #{tpu_custom_call.1} parent=1 // pred_check_branch
      %719 = sbr.rel (0) target = $region61
    $region60: #{tpu_custom_call.1} parent=1 // pred_region
      %720 = dma.done [#allocation12], 128
    $region61: #{tpu_custom_call.1} parent=1 // pred_fallthru
      _
    // Predicated region
    $region62: #{tpu_custom_call.1} parent=1 // pred_check
      _
    $region63: #{tpu_custom_call.1} parent=1 // pred_check_branch
      %722 = sbr.rel (0) target = $region65
    $region64: #{tpu_custom_call.1} parent=1 // pred_region
      %723 = dma.done [#allocation12], 128
    $region65: #{tpu_custom_call.1} parent=1 // pred_fallthru
      _
    %724 = vsyncpa [#allocation3], 1
    %725 = vsyncpa [#allocation6], 1
    %726 = vsyncpa [#allocation9], 1
    %727 = vsyncpa [#allocation4], 1
    %728 = vsyncpa [#allocation12], 1

</llo_original>
